<compile_context>
chip_gen: v7x
topology: tpu7x:2x2x1
jax: 0.10.0
libtpu: 0.0.40
codegen_flags: <defaults>
</compile_context>

<pallas_src>
import jax
import jax.numpy as jnp
from jax.experimental import pallas as pl
from jax.experimental.pallas import tpu as pltpu


def mlp_kernel(x_ref, w1_ref, b1_ref, w2_ref, b2_ref, o_ref):
    # Layer 1 on the MXU, lane-dense: [20, 10] @ [10, TB] + [20, 1] -> [20, TB].
    h = jnp.dot(w1_ref[...], x_ref[...],
                preferred_element_type=jnp.float32) + b1_ref[...]
    # Layer 2: [1, 20] @ [20, TB] + scalar -> [1, TB] (lane-dense output row).
    out = jnp.dot(w2_ref[...], h, preferred_element_type=jnp.float32) + b2_ref[0, 0]
    o_ref[...] = out.astype(o_ref.dtype)


def _round_up(v, m):
    return ((v + m - 1) // m) * m


def simple_model_forward(x, w1, b1_col, w2, b2, *, max_block_b=8192):
    """x: [B, 10] f32; w1: [20, 10]; b1_col: [20, 1]; w2: [1, 20]; b2: [1, 1].

    Returns [B, 1] (same as the PyTorch module).
    """
    B, d_in = x.shape
    d_hidden = w1.shape[0]

    # Lane-dense layout: batch on the 128-lane axis.  (In a real pipeline the
    # producer would emit this layout directly; here the transpose is a cheap
    # XLA op on a tiny [B, 10] array.)
    x_t = x.T                                   # [10, B]
    b2_s = jnp.asarray(b2, dtype=jnp.float32).reshape(1, 1)

    vmem = pltpu.MemorySpace.VMEM
    smem_spec = pl.BlockSpec(memory_space=pltpu.MemorySpace.SMEM)  # scalar b2
    out_shape = jax.ShapeDtypeStruct((1, B), x.dtype)

    if B <= 256:
        # Tiny batch (the literal SimpleModel use case): grid/pipeline
        # bookkeeping is pure overhead, issue a single full-block call.
        out_row = pl.pallas_call(
            mlp_kernel,
            out_shape=out_shape,
            in_specs=[
                pl.BlockSpec(memory_space=vmem),   # x_t   [10, B]
                pl.BlockSpec(memory_space=vmem),   # w1    [20, 10]
                pl.BlockSpec(memory_space=vmem),   # b1    [20, 1]
                pl.BlockSpec(memory_space=vmem),   # w2    [1, 20]
                smem_spec,                         # b2    [1, 1] scalar
            ],
            out_specs=pl.BlockSpec(memory_space=vmem),
        )(x_t, w1, b1_col, w2, b2_s)
        return out_row.reshape(B, 1)

    # Large batch: tile the batch (lane) axis.  Keep >= 2 tiles so a v7x
    # megacore can split them across its two TensorCores, but make each tile
    # as large as possible (up to max_block_b) to amortize per-step overhead.
    tb = min(_round_up(max_block_b, 128),
             _round_up(pl.cdiv(B, 2), 128))
    grid = (pl.cdiv(B, tb),)

    out_row = pl.pallas_call(
        mlp_kernel,
        out_shape=out_shape,
        grid=grid,
        in_specs=[
            pl.BlockSpec((d_in, tb), lambda i: (0, i)),        # x_t tile
            pl.BlockSpec((d_hidden, d_in), lambda i: (0, 0)),  # w1 (resident)
            pl.BlockSpec((d_hidden, 1), lambda i: (0, 0)),     # b1 (resident)
            pl.BlockSpec((1, d_hidden), lambda i: (0, 0)),     # w2 (resident)
            smem_spec,                                         # b2 scalar
        ],
        out_specs=pl.BlockSpec((1, tb), lambda i: (0, i)),
        compiler_params=pltpu.CompilerParams(
            # Batch tiles are independent -> parallel axis lets v7x's two
            # TensorCores split the grid; no-op on single-core v5e/v6e.
            dimension_semantics=("parallel",)),
    )(x_t, w1, b1_col, w2, b2_s)
    return out_row.reshape(B, 1)


def reference_forward(x, w1, b1_col, w2, b2):
    # Plain-JAX reference in PyTorch weight layout.
    return (x @ w1.T + b1_col.T) @ w2.T + b2


if __name__ == "__main__":
    key = jax.random.PRNGKey(0)
    k_x, k_w1, k_b1, k_w2, k_b2, k_x2, k_x3 = jax.random.split(key, 7)

    D_in, D_hidden, D_out = 10, 20, 1

    # Deterministic PyTorch-Linear-style uniform init (weights in PyTorch layout).
    bound1 = 1.0 / (D_in ** 0.5)
    w1 = jax.random.uniform(k_w1, (D_hidden, D_in), jnp.float32, -bound1, bound1)
    b1_col = jax.random.uniform(k_b1, (D_hidden, 1), jnp.float32, -bound1, bound1)
    bound2 = 1.0 / (D_hidden ** 0.5)
    w2 = jax.random.uniform(k_w2, (D_out, D_hidden), jnp.float32, -bound2, bound2)
    b2 = jax.random.uniform(k_b2, (D_out, D_out), jnp.float32, -bound2, bound2)

    # --- Tiny batch (the literal SimpleModel case): single-block, no grid. ---
    x_small = jax.random.normal(k_x, (8, D_in), dtype=jnp.float32)
    out_small = jax.block_until_ready(
        simple_model_forward(x_small, w1, b1_col, w2, b2))
    ref_small = reference_forward(x_small, w1, b1_col, w2, b2)
    assert out_small.shape == (8, D_out)
    assert jnp.allclose(out_small, ref_small, atol=1e-5, rtol=1e-4)

    # --- Larger batch: lane-dense tiled path, 2 parallel tiles of 1024. ---
    x_big = jax.random.normal(k_x2, (2048, D_in), dtype=jnp.float32)
    out_big = jax.block_until_ready(
        simple_model_forward(x_big, w1, b1_col, w2, b2))
    ref_big = reference_forward(x_big, w1, b1_col, w2, b2)
    assert out_big.shape == (2048, D_out)
    assert jnp.allclose(out_big, ref_big, atol=1e-5, rtol=1e-4)

    # --- Ragged batch (not a multiple of the tile): partial last block. ---
    x_odd = jax.random.normal(k_x3, (1000, D_in), dtype=jnp.float32)
    out_odd = jax.block_until_ready(
        simple_model_forward(x_odd, w1, b1_col, w2, b2))
    ref_odd = reference_forward(x_odd, w1, b1_col, w2, b2)
    assert out_odd.shape == (1000, D_out)
    assert jnp.allclose(out_odd, ref_odd, atol=1e-5, rtol=1e-4)

    print("KERNEL_OK")
</pallas_src>

<mosaic_0001>
module attributes {stable_mosaic.version = 11 : i64} {
  func.func @mlp_kernel(%arg0: memref<10x8xf32, #tpu.memory_space<vmem>>, %arg1: memref<20x10xf32, #tpu.memory_space<vmem>>, %arg2: memref<20x1xf32, #tpu.memory_space<vmem>>, %arg3: memref<1x20xf32, #tpu.memory_space<vmem>>, %arg4: memref<1x1xf32, #tpu.memory_space<smem>>, %arg5: memref<1x8xf32, #tpu.memory_space<vmem>>) attributes {dimension_semantics = [], scalar_prefetch = 0 : i64, scratch_operands = 0 : i64, tpu.core_type = #tpu.core_type<tc>} {
    %c0 = arith.constant 0 : index
    %c0_0 = arith.constant 0 : index
    %0 = vector.load %arg1[%c0, %c0_0] : memref<20x10xf32, #tpu.memory_space<vmem>>, vector<20x10xf32>
    %c0_1 = arith.constant 0 : index
    %c0_2 = arith.constant 0 : index
    %1 = vector.load %arg0[%c0_1, %c0_2] : memref<10x8xf32, #tpu.memory_space<vmem>>, vector<10x8xf32>
    %cst = arith.constant dense<0.000000e+00> : vector<20x8xf32>
    %2 = tpu.matmul %0, %1, %cst {dimension_numbers = #tpu.dot_dimension_numbers<[1], [0], [0], [1], [0, 0, 1, 1], [], []>} : vector<20x10xf32>, vector<10x8xf32>, vector<20x8xf32> -> vector<20x8xf32>
    %c0_3 = arith.constant 0 : index
    %c0_4 = arith.constant 0 : index
    %3 = vector.load %arg2[%c0_3, %c0_4] : memref<20x1xf32, #tpu.memory_space<vmem>>, vector<20x1xf32>
    %4 = vector.broadcast %3 : vector<20x1xf32> to vector<20x8xf32>
    %5 = arith.addf %2, %4 : vector<20x8xf32>
    %c0_5 = arith.constant 0 : index
    %c0_6 = arith.constant 0 : index
    %6 = vector.load %arg3[%c0_5, %c0_6] : memref<1x20xf32, #tpu.memory_space<vmem>>, vector<1x20xf32>
    %cst_7 = arith.constant dense<0.000000e+00> : vector<1x8xf32>
    %7 = tpu.matmul %6, %5, %cst_7 {dimension_numbers = #tpu.dot_dimension_numbers<[1], [0], [0], [1], [0, 0, 1, 1], [], []>} : vector<1x20xf32>, vector<20x8xf32>, vector<1x8xf32> -> vector<1x8xf32>
    %c0_8 = arith.constant 0 : index
    %c0_9 = arith.constant 0 : index
    %8 = memref.load %arg4[%c0_8, %c0_9] : memref<1x1xf32, #tpu.memory_space<smem>>
    %9 = vector.broadcast %8 : f32 to vector<1x8xf32>
    %10 = arith.addf %7, %9 : vector<1x8xf32>
    %c0_10 = arith.constant 0 : index
    %c0_11 = arith.constant 0 : index
    %11 = vector.load %arg5[%c0_10, %c0_11] : memref<1x8xf32, #tpu.memory_space<vmem>>, vector<1x8xf32>
    tpu.vector_store %arg5[%c0_10, %c0_11], %10 {strides = array<i32>} : memref<1x8xf32, #tpu.memory_space<vmem>>, vector<1x8xf32>,
    return
  }
}

</mosaic_0001>

<llo_original>
// kernel: tpu_custom_call.1
$region0: #{tpu_custom_call.1}
  #allocation0 [shape = 'u32[]', space=smem, size = 0x4, offset = 0x4, fixed_abs, tag = 'smem constant byte address 0x4 - core index']
  #allocation1 [shape = 'u32[144,128]{1,0:T(1,128)}', space=vmem, size = 0x12000, scoped, tag = 'internal scratch']
  #allocation2 [shape = 'f32[1,1]{1,0:T(1,128)S(6)}', space=smem, size = 0x200, scoped, tag = 'scoped memory for tpu_custom_call.1']
  %s0 = inlined_call_operand.vmem [shape: f32[10,8], index: 0, kind: input, shape index: {}]
  %s1 = inlined_call_operand.vmem [shape: f32[20,10], index: 1, kind: input, shape index: {}]
  %s2 = inlined_call_operand.vmem [shape: f32[20,1], index: 2, kind: input, shape index: {}]
  %s3 = inlined_call_operand.vmem [shape: f32[1,20], index: 3, kind: input, shape index: {}]
  %s4 = inlined_call_operand.<no memory space> [shape: f32[1,1], index: 4, kind: input, shape index: {}]
  %s5 = inlined_call_operand.hbm [shape: f32[1,8], index: 5, kind: output, shape index: {}]
  %s6 = sld [smem:[#allocation0]]
  $region30: #{tpu_custom_call.1} parent=0
    _
  %s8 = ssub.s32 1, %s6
  %s9 = scalar_select 0, %s8, %s6
  %10 = sst [smem:[#allocation2]] %s4
  $region1: #{tpu_custom_call.1} parent=0
    #allocation3 [shape = 'u8[512]{0}', space=vmem, size = 0x400, scoped, tag = 'output window, operand 0, single buffered']
    #allocation4 [shape = 's32[1]{0}', space=sflag, size = 0x4, scoped, tag = 'scoped memory for tpu_custom_call.1']
    %11 = vsyncpa [#allocation4], 0
    // Predicated region
    $region2: #{tpu_custom_call.1} parent=1 // pred_check
      _
    $region3: #{tpu_custom_call.1} parent=1 // pred_check_branch
      %13 = sbr.rel (0) target = $region5
    $region4: #{tpu_custom_call.1} parent=1 // pred_region
      _
    $region5: #{tpu_custom_call.1} parent=1 // pred_fallthru
      _
    // Predicated region
    $region6: #{tpu_custom_call.1} parent=1 // pred_check
      _
    $region7: #{tpu_custom_call.1} parent=1 // pred_check_branch
      %15 = sbr.rel (0) target = $region9
    $region8: #{tpu_custom_call.1} parent=1 // pred_region
      _
    $region9: #{tpu_custom_call.1} parent=1 // pred_fallthru
      _
    // Predicated region
    $region10: #{tpu_custom_call.1} parent=1 // pred_check
      _
    $region11: #{tpu_custom_call.1} parent=1 // pred_check_branch
      %17 = sbr.rel (0) target = $region13
    $region12: #{tpu_custom_call.1} parent=1 // pred_region
      _
    $region13: #{tpu_custom_call.1} parent=1 // pred_fallthru
      _
    // Predicated region
    $region14: #{tpu_custom_call.1} parent=1 // pred_check
      _
    $region15: #{tpu_custom_call.1} parent=1 // pred_check_branch
      %19 = sbr.rel (0) target = $region17
    $region16: #{tpu_custom_call.1} parent=1 // pred_region
      _
    $region17: #{tpu_custom_call.1} parent=1 // pred_fallthru
      _
    // Predicated region
    $region18: #{tpu_custom_call.1} parent=1 // pred_check
      _
    $region19: #{tpu_custom_call.1} parent=1 // pred_check_branch
      %21 = sbr.rel (0) target = $region21
    $region20: #{tpu_custom_call.1} parent=1 // pred_region
      _
    $region21: #{tpu_custom_call.1} parent=1 // pred_fallthru
      _
    %v22 = vld [vmem:[%s1] sm:$0xff]
    %v23 = vld [vmem:[%s1 + $0x8] sm:$0xff]
    %v24 = vld [vmem:[%s1 + $0x10] sm:$0xf]
    %v25 = vld [vmem:[%s0] sm:$0xff]
    %v26 = vld [vmem:[%s0 + $0x8] sm:$0x3]
    %v27 = vld [vmem:[%s2] sm:$0xff]
    %v28 = vld [vmem:[%s2 + $0x8] sm:$0xff]
    %v29 = vld [vmem:[%s2 + $0x10] sm:$0xf]
    %31 = vset.pattern.permute.xlu0 0
    %32 = vperm.xlu0 %31, %v27
    %v33 = vpop.permute.xlu0 %32
    %36 = vset.pattern.permute.xlu0 0
    %37 = vperm.xlu0 %36, %v28
    %v38 = vpop.permute.xlu0 %37
    %41 = vset.pattern.permute.xlu0 0
    %42 = vperm.xlu0 %41, %v29
    %v43 = vpop.permute.xlu0 %42
    %vm45 = vcmask 80896
    %v47 = vsel %vm45, %v22, 0
    %v50 = vsel %vm45, %v23, 0
    %v53 = vsel %vm45, %v24, 0
    %vm55 = vcmask 1041408
    %v57 = vsel %vm55, %v26, 0
    %59 = vmatprep.subr.mxu0 0.0
    %60 = vmatpush1.msra.mxu0 %v25
    %61 = vmatprep.subr.mxu0 0.0
    %62 = vmatpush1.msra.mxu0 %v57
    %63 = vmatprep.subr.mxu0 0.0
    %64 = vmatpush1.msra.mxu0 0.0
    %65 = vmatprep.subr.mxu0 0.0
    %66 = vmatpush1.msra.mxu0 0.0
    %67 = vmatprep.subr.mxu0 0.0
    %68 = vmatpush1.msra.mxu0 0.0
    %69 = vmatprep.subr.mxu0 0.0
    %70 = vmatpush1.msra.mxu0 0.0
    %71 = vmatprep.subr.mxu0 0.0
    %72 = vmatpush1.msra.mxu0 0.0
    %73 = vmatprep.subr.mxu0 0.0
    %74 = vmatpush1.msra.mxu0 0.0
    %75 = vmatprep.subr.mxu0 0.0
    %76 = vmatpush1.msra.mxu0 0.0
    %77 = vmatprep.subr.mxu0 0.0
    %78 = vmatpush1.msra.mxu0 0.0
    %79 = vmatprep.subr.mxu0 0.0
    %80 = vmatpush1.msra.mxu0 0.0
    %81 = vmatprep.subr.mxu0 0.0
    %82 = vmatpush1.msra.mxu0 0.0
    %83 = vmatprep.subr.mxu0 0.0
    %84 = vmatpush1.msra.mxu0 0.0
    %85 = vmatprep.subr.mxu0 0.0
    %86 = vmatpush1.msra.mxu0 0.0
    %87 = vmatprep.subr.mxu0 0.0
    %88 = vmatpush1.msra.mxu0 0.0
    %89 = vmatprep.subr.mxu0 0.0
    %90 = vmatpush1.msra.mxu0 0.0
    %91 = vmatprep.subr.mxu0 0.0
    %92 = vmatpush1.msra.mxu0 0.0
    %93 = vmatprep.subr.mxu0 0.0
    %94 = vmatpush1.msra.mxu0 0.0
    %95 = vmatprep.subr.mxu0 0.0
    %96 = vmatpush1.msra.mxu0 0.0
    %97 = vmatprep.subr.mxu0 0.0
    %98 = vmatpush1.msra.mxu0 0.0
    %99 = vmatprep.subr.mxu0 0.0
    %100 = vmatpush1.msra.mxu0 0.0
    %101 = vmatprep.subr.mxu0 0.0
    %102 = vmatpush1.msra.mxu0 0.0
    %103 = vmatprep.subr.mxu0 0.0
    %104 = vmatpush1.msra.mxu0 0.0
    %105 = vmatprep.subr.mxu0 0.0
    %106 = vmatpush1.msra.mxu0 0.0
    %107 = vmatprep.subr.mxu0 0.0
    %108 = vmatpush1.msra.mxu0 0.0
    %109 = vmatprep.subr.mxu0 0.0
    %110 = vmatpush1.msra.mxu0 0.0
    %111 = vmatprep.subr.mxu0 0.0
    %112 = vmatpush1.msra.mxu0 0.0
    %113 = vmatprep.subr.mxu0 0.0
    %114 = vmatpush1.msra.mxu0 0.0
    %115 = vmatprep.subr.mxu0 0.0
    %116 = vmatpush1.msra.mxu0 0.0
    %117 = vmatprep.subr.mxu0 0.0
    %118 = vmatpush1.msra.mxu0 0.0
    %119 = vmatprep.subr.mxu0 0.0
    %120 = vmatpush1.msra.mxu0 0.0
    %121 = vmatprep.subr.mxu0 0.0
    %122 = vmatpush1.msra.mxu0 0.0
    %123 = vmatprep.mubr.f32.mxu0 0.0
    %124 = vmatmul.mubr.f32.gmra.mrb[0].mxu0 %v47
    %v125 = vpop.f32.mrb[0].mxu0
    %v126 = vadd.f32 %v33, %v125
    %v127 = vpop.f32.mrb[0].mxu0
    %128 = vmatprep.mubr.f32.mxu0 0.0
    %129 = vmatmul.mubr.f32.gmra.mrb[0].mxu0 %v50
    %v130 = vpop.f32.mrb[0].mxu0
    %v131 = vadd.f32 %v38, %v130
    %v132 = vpop.f32.mrb[0].mxu0
    %133 = vmatprep.mubr.f32.mxu0 0.0
    %134 = vmatmul.mubr.f32.gmra.mrb[0].mxu0 %v53
    %v135 = vpop.f32.mrb[0].mxu0
    %v136 = vadd.f32 %v43, %v135
    %v137 = vpop.f32.mrb[0].mxu0
    %138 = vdwg.mxu0
    %v139 = vld [vmem:[%s3] sm:$0x1]
    %s140 = sld [smem:[#allocation2]]
    %v141 = vstv %s140
    %vm142 = vcmask 162816
    %v144 = vsel %vm142, %v139, 0
    %vm146 = vcmask 1043456
    %v148 = vsel %vm146, %v136, 0
    %150 = vmatprep.subr.mxu0 0.0
    %151 = vmatpush1.msra.mxu0 %v126
    %152 = vmatprep.subr.mxu0 0.0
    %153 = vmatpush1.msra.mxu0 %v131
    %154 = vmatprep.subr.mxu0 0.0
    %155 = vmatpush1.msra.mxu0 %v148
    %156 = vmatprep.subr.mxu0 0.0
    %157 = vmatpush1.msra.mxu0 0.0
    %158 = vmatprep.subr.mxu0 0.0
    %159 = vmatpush1.msra.mxu0 0.0
    %160 = vmatprep.subr.mxu0 0.0
    %161 = vmatpush1.msra.mxu0 0.0
    %162 = vmatprep.subr.mxu0 0.0
    %163 = vmatpush1.msra.mxu0 0.0
    %164 = vmatprep.subr.mxu0 0.0
    %165 = vmatpush1.msra.mxu0 0.0
    %166 = vmatprep.subr.mxu0 0.0
    %167 = vmatpush1.msra.mxu0 0.0
    %168 = vmatprep.subr.mxu0 0.0
    %169 = vmatpush1.msra.mxu0 0.0
    %170 = vmatprep.subr.mxu0 0.0
    %171 = vmatpush1.msra.mxu0 0.0
    %172 = vmatprep.subr.mxu0 0.0
    %173 = vmatpush1.msra.mxu0 0.0
    %174 = vmatprep.subr.mxu0 0.0
    %175 = vmatpush1.msra.mxu0 0.0
    %176 = vmatprep.subr.mxu0 0.0
    %177 = vmatpush1.msra.mxu0 0.0
    %178 = vmatprep.subr.mxu0 0.0
    %179 = vmatpush1.msra.mxu0 0.0
    %180 = vmatprep.subr.mxu0 0.0
    %181 = vmatpush1.msra.mxu0 0.0
    %182 = vmatprep.subr.mxu0 0.0
    %183 = vmatpush1.msra.mxu0 0.0
    %184 = vmatprep.subr.mxu0 0.0
    %185 = vmatpush1.msra.mxu0 0.0
    %186 = vmatprep.subr.mxu0 0.0
    %187 = vmatpush1.msra.mxu0 0.0
    %188 = vmatprep.subr.mxu0 0.0
    %189 = vmatpush1.msra.mxu0 0.0
    %190 = vmatprep.subr.mxu0 0.0
    %191 = vmatpush1.msra.mxu0 0.0
    %192 = vmatprep.subr.mxu0 0.0
    %193 = vmatpush1.msra.mxu0 0.0
    %194 = vmatprep.subr.mxu0 0.0
    %195 = vmatpush1.msra.mxu0 0.0
    %196 = vmatprep.subr.mxu0 0.0
    %197 = vmatpush1.msra.mxu0 0.0
    %198 = vmatprep.subr.mxu0 0.0
    %199 = vmatpush1.msra.mxu0 0.0
    %200 = vmatprep.subr.mxu0 0.0
    %201 = vmatpush1.msra.mxu0 0.0
    %202 = vmatprep.subr.mxu0 0.0
    %203 = vmatpush1.msra.mxu0 0.0
    %204 = vmatprep.subr.mxu0 0.0
    %205 = vmatpush1.msra.mxu0 0.0
    %206 = vmatprep.subr.mxu0 0.0
    %207 = vmatpush1.msra.mxu0 0.0
    %208 = vmatprep.subr.mxu0 0.0
    %209 = vmatpush1.msra.mxu0 0.0
    %210 = vmatprep.subr.mxu0 0.0
    %211 = vmatpush1.msra.mxu0 0.0
    %212 = vmatprep.subr.mxu0 0.0
    %213 = vmatpush1.msra.mxu0 0.0
    %214 = vmatprep.mubr.f32.mxu0 0.0
    %215 = vmatmul.mubr.f32.gmra.mrb[0].mxu0 %v144
    %v216 = vpop.f32.mrb[0].mxu0
    %v217 = vadd.f32 %v141, %v216
    %v218 = vpop.f32.mrb[0].mxu0
    %219 = vdwg.mxu0
    %vm220 = vcmask 57344
    %221 = vst.msk [vmem:[#allocation3] sm:$0x1] %vm220, %v217
    // Predicated region
    $region22: #{tpu_custom_call.1} parent=1 // pred_check
      _
    $region23: #{tpu_custom_call.1} parent=1 // pred_check_branch
      %223 = sbr.rel (0) target = $region25
    $region24: #{tpu_custom_call.1} parent=1 // pred_region
      %s225 = ssub.s32 16, 16
      %226 = vsyncadd [#allocation4], %s225
      %s228 = sshll.u32 [#allocation3], 4
      %s229 = int_to_ptr.vmem [resolvable:$true] %s228
      %231 = dma.vmem_to_hbm [thread:$0]  %s229, 16, %s5, [#allocation4]
    $region25: #{tpu_custom_call.1} parent=1 // pred_fallthru
      _
    // Predicated region
    $region26: #{tpu_custom_call.1} parent=1 // pred_check
      _
    $region27: #{tpu_custom_call.1} parent=1 // pred_check_branch
      %233 = sbr.rel (0) target = $region29
    $region28: #{tpu_custom_call.1} parent=1 // pred_region
      %234 = dma.done [#allocation4], 16
    $region29: #{tpu_custom_call.1} parent=1 // pred_fallthru
      _
    %235 = vsyncpa [#allocation4], 1

</llo_original>
